<compile_context>
chip_gen: v7x
topology: tpu7x:2x2x1
jax: 0.10.0
libtpu: 0.0.40
codegen_flags: <defaults>
</compile_context>

<pallas_src>
import jax
import jax.numpy as jnp
from jax.experimental import pallas as pl
from jax.experimental.pallas import tpu as pltpu


def _round_up(n, m):
    return (n + m - 1) // m * m


def _collapsed_mlp_kernel(x_ref, w_ref, b_ref, o_ref):
    # x_ref: (TB, 20) natural-layout batch tile   (VMEM, pipelined)
    # w_ref: (20, 1)  folded weight column        (VMEM, resident across grid)
    # b_ref: (1,)     folded bias                 (SMEM scalar)
    # o_ref: (1, TB)  lane-dense output tile      (VMEM)
    xt = x_ref[...].T                              # (20, TB): XLU transpose, hidden under DMA
    # y[j] = sum_k w[k] * x[j, k] -- VPU broadcast-multiply + sublane reduce.
    y = jnp.sum(xt * w_ref[...], axis=0, keepdims=True) + b_ref[0]
    o_ref[...] = y.astype(o_ref.dtype)


def standard_net_forward(x, w1, b1, w2, b2, *, batch_tile=8192):
    """Forward pass of StandardNet.

    x : (B, 20) float32
    w1: (40, 20), b1: (40,)  -- PyTorch nn.Linear(20, 40) layout (out, in)
    w2: (1, 40),  b2: (1,)   -- PyTorch nn.Linear(40, 1)  layout (out, in)
    returns (B, 1) float32
    """
    B, F = x.shape

    # Fold the two affine layers once (tiny (20,40)@(40,1) matmul, done by XLA).
    w_eff = (w1.T @ w2.T).astype(jnp.float32)                 # (20, 1)
    b_eff = (b1 @ w2.T + b2).reshape(1).astype(jnp.float32)   # (1,)

    # Batch tile: multiple of 128 (lane-dense output), capped by batch_tile and B.
    tb = max(128, min(_round_up(batch_tile, 128), _round_up(B, 128)))
    n_tiles = pl.cdiv(B, tb)
    b_out = n_tiles * tb                                      # padded output lanes only

    # VMEM budget (bytes): x buffers are lane-padded 20->128 (512*tb each, x2 for
    # double buffering), transposed/product temps ~96*tb each, output ~32*tb each.
    vmem_needed = tb * (2 * 512 + 4 * 96 + 2 * 32) + (1 << 20)
    vmem_limit = int(min(48 * 2**20, max(32 * 2**20, vmem_needed)))

    yt = pl.pallas_call(
        _collapsed_mlp_kernel,
        out_shape=jax.ShapeDtypeStruct((1, b_out), x.dtype),
        grid=(n_tiles,),
        in_specs=[
            # TODO(synk): on v7x, pipeline_mode=pl.Buffered(3) here if profiling
            # still shows exposed DMA latency per step.
            pl.BlockSpec((tb, F), lambda i: (i, 0)),            # x tile, natural layout
            pl.BlockSpec((F, 1), lambda i: (0, 0)),             # folded weights, resident
            pl.BlockSpec(memory_space=pltpu.MemorySpace.SMEM),  # folded bias scalar
        ],
        out_specs=pl.BlockSpec((1, tb), lambda i: (0, i)),      # lane-dense output slab
        compiler_params=pltpu.CompilerParams(
            # Batch axis is independent; on v7x consider pltpu.CORE_PARALLEL if a
            # profile shows a single TensorCore running all steps.
            dimension_semantics=("parallel",),
            vmem_limit_bytes=vmem_limit,
        ),
    )(x, w_eff, b_eff)

    return yt[0, :B].reshape(B, 1)


if __name__ == "__main__":
    key = jax.random.PRNGKey(0)
    kx, k1, k2, k3, k4 = jax.random.split(key, 5)

    # PyTorch nn.Linear default init: U(-1/sqrt(fan_in), +1/sqrt(fan_in)), (out, in) layout.
    bound1 = 1.0 / jnp.sqrt(20.0)
    bound2 = 1.0 / jnp.sqrt(40.0)
    w1 = jax.random.uniform(k1, (40, 20), jnp.float32, -bound1, bound1)
    b1 = jax.random.uniform(k2, (40,), jnp.float32, -bound1, bound1)
    w2 = jax.random.uniform(k3, (1, 40), jnp.float32, -bound2, bound2)
    b2 = jax.random.uniform(k4, (1,), jnp.float32, -bound2, bound2)

    def ref_forward(xx):
        return (xx @ w1.T + b1) @ w2.T + b2

    # Small demo batch: single (overhanging) block, batch 8 on 128 lanes.
    batch = 8
    x_small = jax.random.normal(kx, (batch, 20), jnp.float32)
    out_small = jax.block_until_ready(standard_net_forward(x_small, w1, b1, w2, b2))
    assert out_small.shape == (batch, 1)
    assert jnp.allclose(out_small, ref_forward(x_small), atol=1e-4, rtol=1e-4)

    # Non-aligned batch with a multi-step grid and a partial final input block
    # (exercises the unpadded cdiv grid + padded-output slicing path).
    x_big = jax.random.normal(kx, (1000, 20), jnp.float32)
    out_big = jax.block_until_ready(
        standard_net_forward(x_big, w1, b1, w2, b2, batch_tile=256))
    assert out_big.shape == (1000, 1)
    assert jnp.allclose(out_big, ref_forward(x_big), atol=1e-4, rtol=1e-4)

    print("KERNEL_OK")
</pallas_src>

<mosaic_0001>
module attributes {stable_mosaic.version = 11 : i64} {
  func.func @_collapsed_mlp_kernel(%arg0: i32, %arg1: memref<128x20xf32, #tpu.memory_space<vmem>>, %arg2: memref<20x1xf32, #tpu.memory_space<vmem>>, %arg3: memref<1xf32, #tpu.memory_space<smem>>, %arg4: memref<1x128xf32, #tpu.memory_space<vmem>>) attributes {dimension_semantics = [#tpu.dimension_semantics<parallel>], iteration_bounds = array<i64: 1>, scalar_prefetch = 0 : i64, scratch_operands = 0 : i64, tpu.core_type = #tpu.core_type<tc>, window_params = [{transform_indices = @transform_0, window_bounds = array<i64: 128, 20>}, {pipeline_mode = #tpu.pipeline_mode<synchronous>, transform_indices = @transform_1, window_bounds = array<i64: 20, 1>}, {transform_indices = @transform_2, window_bounds = array<i64: 1>}, {transform_indices = @transform_3, window_bounds = array<i64: 1, 128>}]} {
    %c0 = arith.constant 0 : index
    %c0_0 = arith.constant 0 : index
    %0 = vector.load %arg1[%c0, %c0_0] : memref<128x20xf32, #tpu.memory_space<vmem>>, vector<128x20xf32>
    %1 = tpu.transpose %0, [1, 0] : vector<128x20xf32> -> vector<20x128xf32>
    %c0_1 = arith.constant 0 : index
    %c0_2 = arith.constant 0 : index
    %2 = vector.load %arg2[%c0_1, %c0_2] : memref<20x1xf32, #tpu.memory_space<vmem>>, vector<20x1xf32>
    %3 = vector.broadcast %2 : vector<20x1xf32> to vector<20x128xf32>
    %4 = arith.mulf %1, %3 : vector<20x128xf32>
    %cst = arith.constant dense<0.000000e+00> : vector<128xf32>
    %5 = vector.multi_reduction <add>, %4, %cst [0] : vector<20x128xf32> to vector<128xf32>
    %6 = vector.shape_cast %5 : vector<128xf32> to vector<1x128xf32>
    %c0_3 = arith.constant 0 : index
    %7 = memref.load %arg3[%c0_3] : memref<1xf32, #tpu.memory_space<smem>>
    %8 = vector.broadcast %7 : f32 to vector<1x128xf32>
    %9 = arith.addf %6, %8 : vector<1x128xf32>
    %c0_4 = arith.constant 0 : index
    %c0_5 = arith.constant 0 : index
    %10 = vector.load %arg4[%c0_4, %c0_5] : memref<1x128xf32, #tpu.memory_space<vmem>>, vector<1x128xf32>
    tpu.vector_store %arg4[%c0_4, %c0_5], %9 {strides = array<i32>} : memref<1x128xf32, #tpu.memory_space<vmem>>, vector<1x128xf32>,
    return
  }
  func.func @transform_0(%arg0: i32) -> (i32, i32) {
    %c0_i32 = arith.constant 0 : i32
    %c0_i32_0 = arith.constant 0 : i32
    return %arg0, %c0_i32 : i32, i32
  }
  func.func @transform_1(%arg0: i32) -> (i32, i32) {
    %c0_i32 = arith.constant 0 : i32
    %c0_i32_0 = arith.constant 0 : i32
    %c0_i32_1 = arith.constant 0 : i32
    return %c0_i32, %c0_i32_0 : i32, i32
  }
  func.func @transform_2(%arg0: i32) -> i32 {
    %c0_i32 = arith.constant 0 : i32
    %c0_i32_0 = arith.constant 0 : i32
    return %c0_i32 : i32
  }
  func.func @transform_3(%arg0: i32) -> (i32, i32) {
    %c0_i32 = arith.constant 0 : i32
    %c0_i32_0 = arith.constant 0 : i32
    return %c0_i32, %arg0 : i32, i32
  }
}

</mosaic_0001>

<llo_original>
// kernel: tpu_custom_call.1
$region0: #{tpu_custom_call.1}
  #allocation0 [shape = 'u32[]', space=smem, size = 0x4, offset = 0x4, fixed_abs, tag = 'smem constant byte address 0x4 - core index']
  #allocation1 [shape = 'u32[144,128]{1,0:T(1,128)}', space=vmem, size = 0x12000, scoped, tag = 'internal scratch']
  #allocation2 [shape = 'f32[1]{0:T(128)S(6)}', space=smem, size = 0x200, scoped, tag = 'scoped memory for tpu_custom_call.1']
  %s0 = inlined_call_operand.vmem [shape: f32[8,20], index: 0, kind: input, shape index: {}]
  %s1 = inlined_call_operand.vmem [shape: f32[20,1], index: 1, kind: input, shape index: {}]
  %s2 = inlined_call_operand.<no memory space> [shape: f32[1], index: 2, kind: input, shape index: {}]
  %s3 = inlined_call_operand.hbm [shape: f32[1,128], index: 3, kind: output, shape index: {}]
  %s4 = sld [smem:[#allocation0]]
  $region22: #{tpu_custom_call.1} parent=0
    _
  %s6 = ssub.s32 1, %s4
  %s7 = scalar_select 0, %s6, %s4
  %8 = sst [smem:[#allocation2]] %s2
  $region1: #{tpu_custom_call.1} parent=0
    #allocation3 [shape = 'u8[512]{0}', space=vmem, size = 0x400, scoped, tag = 'output window, operand 0, single buffered']
    #allocation4 [shape = 's32[1]{0}', space=sflag, size = 0x4, scoped, tag = 'scoped memory for tpu_custom_call.1']
    %9 = vsyncpa [#allocation4], 0
    // Predicated region
    $region2: #{tpu_custom_call.1} parent=1 // pred_check
      _
    $region3: #{tpu_custom_call.1} parent=1 // pred_check_branch
      %11 = sbr.rel (0) target = $region5
    $region4: #{tpu_custom_call.1} parent=1 // pred_region
      _
    $region5: #{tpu_custom_call.1} parent=1 // pred_fallthru
      _
    // Predicated region
    $region6: #{tpu_custom_call.1} parent=1 // pred_check
      _
    $region7: #{tpu_custom_call.1} parent=1 // pred_check_branch
      %13 = sbr.rel (0) target = $region9
    $region8: #{tpu_custom_call.1} parent=1 // pred_region
      _
    $region9: #{tpu_custom_call.1} parent=1 // pred_fallthru
      _
    // Predicated region
    $region10: #{tpu_custom_call.1} parent=1 // pred_check
      _
    $region11: #{tpu_custom_call.1} parent=1 // pred_check_branch
      %15 = sbr.rel (0) target = $region13
    $region12: #{tpu_custom_call.1} parent=1 // pred_region
      _
    $region13: #{tpu_custom_call.1} parent=1 // pred_fallthru
      _
    %v16 = vld [vmem:[%s0] sm:$0xff]
    %v17 = vld [vmem:[%s0 + $0x8] sm:$0xff]
    %v18 = vld [vmem:[%s0 + $0x10] sm:$0xff]
    %v19 = vld [vmem:[%s0 + $0x18] sm:$0xff]
    %v20 = vld [vmem:[%s0 + $0x20] sm:$0xff]
    %v21 = vld [vmem:[%s0 + $0x28] sm:$0xff]
    %v22 = vld [vmem:[%s0 + $0x30] sm:$0xff]
    %v23 = vld [vmem:[%s0 + $0x38] sm:$0xff]
    %v24 = vld [vmem:[%s0 + $0x40] sm:$0xff]
    %v25 = vld [vmem:[%s0 + $0x48] sm:$0xff]
    %v26 = vld [vmem:[%s0 + $0x50] sm:$0xff]
    %v27 = vld [vmem:[%s0 + $0x58] sm:$0xff]
    %v28 = vld [vmem:[%s0 + $0x60] sm:$0xff]
    %v29 = vld [vmem:[%s0 + $0x68] sm:$0xff]
    %v30 = vld [vmem:[%s0 + $0x70] sm:$0xff]
    %v31 = vld [vmem:[%s0 + $0x78] sm:$0xff]
    %32 = vxpose.xlu0.b32.start [1/16] %v16, 128
    %33 = vxpose.xlu0.b32.cont [2/16] %v17, 128
    %34 = vxpose.xlu0.b32.cont [3/16] %v18, 128
    %35 = vxpose.xlu0.b32.cont [4/16] %v19, 128
    %36 = vxpose.xlu0.b32.cont [5/16] %v20, 128
    %37 = vxpose.xlu0.b32.cont [6/16] %v21, 128
    %38 = vxpose.xlu0.b32.cont [7/16] %v22, 128
    %39 = vxpose.xlu0.b32.cont [8/16] %v23, 128
    %40 = vxpose.xlu0.b32.cont [9/16] %v24, 128
    %41 = vxpose.xlu0.b32.cont [10/16] %v25, 128
    %42 = vxpose.xlu0.b32.cont [11/16] %v26, 128
    %43 = vxpose.xlu0.b32.cont [12/16] %v27, 128
    %44 = vxpose.xlu0.b32.cont [13/16] %v28, 128
    %45 = vxpose.xlu0.b32.cont [14/16] %v29, 128
    %46 = vxpose.xlu0.b32.cont [15/16] %v30, 128
    %47 = vxpose.xlu0.b32.end [16/16] %v31, 128
    %v48 = vpop.trf.xlu0
    %v49 = vpop.trf.xlu0
    %v50 = vpop.trf.xlu0
    %v51 = vpop.trf.xlu0
    %v52 = vpop.trf.xlu0
    %v53 = vpop.trf.xlu0
    %v54 = vpop.trf.xlu0
    %v55 = vpop.trf.xlu0
    %v56 = vpop.trf.xlu0
    %v57 = vpop.trf.xlu0
    %v58 = vpop.trf.xlu0
    %v59 = vpop.trf.xlu0
    %v60 = vpop.trf.xlu0
    %v61 = vpop.trf.xlu0
    %v62 = vpop.trf.xlu0
    %v63 = vpop.trf.xlu0
    %v64 = vld [vmem:[%s1] sm:$0xff]
    %v65 = vld [vmem:[%s1 + $0x8] sm:$0xff]
    %v66 = vld [vmem:[%s1 + $0x10] sm:$0xf]
    %68 = vset.pattern.permute.xlu0 0
    %69 = vperm.xlu0 %68, %v64
    %v70 = vpop.permute.xlu0 %69
    %73 = vset.pattern.permute.xlu0 0
    %74 = vperm.xlu0 %73, %v65
    %v75 = vpop.permute.xlu0 %74
    %78 = vset.pattern.permute.xlu0 0
    %79 = vperm.xlu0 %78, %v66
    %v80 = vpop.permute.xlu0 %79
    %v82 = vmul.f32 %v48, %v70
    %v83 = vmul.f32 %v49, %v75
    %v84 = vmul.f32 %v50, %v80
    %v85 = vadd.f32 %v82, %v83
    %vm86 = vcmask 1043456
    %v87 = vsel %vm86, %v84, 0.0
    %v88 = vadd.f32 %v85, %v87
    %v89 = vrot.slane %v88, 4
    %v90 = vadd.f32 %v88, %v89
    %v91 = vrot.slane %v90, 2
    %v92 = vadd.f32 %v90, %v91
    %v93 = vrot.slane %v92, 1
    %v94 = vadd.f32 %v92, %v93
    %s95 = sld [smem:[#allocation2]]
    %v96 = vstv %s95
    %v97 = vadd.f32 %v94, %v96
    %98 = vst [vmem:[#allocation3] sm:$0x1] %v97
    // Predicated region
    $region14: #{tpu_custom_call.1} parent=1 // pred_check
      _
    $region15: #{tpu_custom_call.1} parent=1 // pred_check_branch
      %100 = sbr.rel (0) target = $region17
    $region16: #{tpu_custom_call.1} parent=1 // pred_region
      %s102 = ssub.s32 16, 16
      %103 = vsyncadd [#allocation4], %s102
      %s105 = sshll.u32 [#allocation3], 4
      %s106 = int_to_ptr.vmem [resolvable:$true] %s105
      %108 = dma.vmem_to_hbm [thread:$0]  %s106, 16, %s3, [#allocation4]
    $region17: #{tpu_custom_call.1} parent=1 // pred_fallthru
      _
    // Predicated region
    $region18: #{tpu_custom_call.1} parent=1 // pred_check
      _
    $region19: #{tpu_custom_call.1} parent=1 // pred_check_branch
      %110 = sbr.rel (0) target = $region21
    $region20: #{tpu_custom_call.1} parent=1 // pred_region
      %111 = dma.done [#allocation4], 16
    $region21: #{tpu_custom_call.1} parent=1 // pred_fallthru
      _
    %112 = vsyncpa [#allocation4], 1

</llo_original>
